<compile_context>
chip_gen: v5e
topology: v5e:2x2
jax: 0.10.0
libtpu: 0.0.40
codegen_flags: <defaults>
</compile_context>

<pallas_src>
import functools

import jax
import jax.numpy as jnp
from jax.experimental import pallas as pl
from jax.experimental.pallas import tpu as pltpu

LN_EPS = 1e-5  # PyTorch nn.LayerNorm default


def _round_up(x, m):
    return ((x + m - 1) // m) * m


def _fused_linear_ln_kernel(d1, d2, d1p,
                            x1_ref, x2_ref,
                            w1_ref, b1_ref, g1_ref, bt1_ref,
                            w2_ref, b2_ref, g2_ref, bt2_ref,
                            o_ref):
    """Fused (Linear + LayerNorm) x 2 over one row tile.

    x1_ref: (TM, Din1)     x2_ref: (TM, Din2)
    w*_ref: (Din, Dout)    b*/g*/bt*_ref: (1, Dout)
    o_ref:  (TM, Dslab)    proj1 -> lanes [0, d1); proj2 -> lanes [d1p, d1p+d2)
                           with d1p = round_up(d1, 128) so the proj2 store is
                           128-lane aligned (no XLU lane shift).  Pad lanes are
                           never written; the wrapper slices them away.
    """

    def proj(x_ref, w_ref, b_ref, g_ref, beta_ref):
        # Linear (MXU): operands fed in their native dtype, f32 accumulation.
        y = jnp.dot(x_ref[...], w_ref[...], preferred_element_type=jnp.float32)
        y = y + b_ref[...].astype(jnp.float32)
        # LayerNorm over the (un-padded) feature axis, in f32.
        mean = jnp.mean(y, axis=-1, keepdims=True)
        centered = y - mean
        var = jnp.mean(centered * centered, axis=-1, keepdims=True)
        y_norm = centered * jax.lax.rsqrt(var + LN_EPS)
        return y_norm * g_ref[...].astype(jnp.float32) + beta_ref[...].astype(jnp.float32)

    # Direct sub-slice stores: no concatenate temp, no zero fill of pad lanes.
    o_ref[:, :d1] = proj(x1_ref, w1_ref, b1_ref, g1_ref, bt1_ref).astype(o_ref.dtype)
    o_ref[:, d1p:d1p + d2] = proj(x2_ref, w2_ref, b2_ref, g2_ref, bt2_ref).astype(o_ref.dtype)


def _tile_and_vmem(M, Din1, Din2, Dslab, x_bytes, out_bytes, resident_bytes, sublane):
    """Pick (TM, vmem_limit_bytes) per generation; shrink TM to fit the budget."""
    try:
        info = pltpu.get_tpu_info()
        vmem_cap = int(getattr(info, "vmem_capacity_bytes", 0)) or 64 * 1024 * 1024
    except Exception:  # off-device / API drift -> conservative (v7x-sized) defaults
        vmem_cap = 64 * 1024 * 1024

    if vmem_cap >= 100 * 1024 * 1024:
        # v5e / v6e: 128 MiB physical VMEM -> larger scope + larger row tiles
        vmem_limit = 64 * 1024 * 1024
        tm_cap = 1024
    else:
        # v7x: 64 MiB physical VMEM -> stay conservative
        vmem_limit = 32 * 1024 * 1024
        tm_cap = 512

    tm = min(tm_cap, _round_up(M, sublane))

    def working_set(t):
        # BlockSpec double-buffers every operand (including the constant-index
        # resident weights -> 2 * resident_bytes).
        return (2 * t * (Din1 + Din2) * x_bytes
                + 2 * t * Dslab * out_bytes
                + 2 * resident_bytes)

    budget = int(0.75 * vmem_limit)
    while tm > sublane and working_set(tm) > budget:
        tm = max(sublane, _round_up(tm // 2, sublane))
    return tm, vmem_limit


def _fused_linear_layernorm(x1_2d, x2_2d,
                            w1, b1, g1, beta1,
                            w2, b2, g2, beta2,
                            use_bf16_matmul=False):
    """x1_2d: (M, Din1), x2_2d: (M, Din2) -> ((M, D1), (M, D2))."""
    assert x1_2d.shape[0] == x2_2d.shape[0], "both sequences share (batch*seq)"
    M = x1_2d.shape[0]
    Din1, D1 = w1.shape
    Din2, D2 = w2.shape
    out_dtype = x1_2d.dtype

    if use_bf16_matmul:
        # Halves HBM traffic for the dominant activation/weight streams and
        # hits the native bf16 MXU path (f32 accumulation + f32 LN retained).
        x1_2d = x1_2d.astype(jnp.bfloat16)
        x2_2d = x2_2d.astype(jnp.bfloat16)
        w1 = w1.astype(jnp.bfloat16)
        w2 = w2.astype(jnp.bfloat16)

    # Output slab layout: proj1 at lane 0, proj2 at a 128-aligned lane offset.
    D1p = _round_up(D1, 128)
    D2p = _round_up(D2, 128)
    Dslab = D1p + D2p

    x_bytes = jnp.dtype(x1_2d.dtype).itemsize
    w_bytes = jnp.dtype(w1.dtype).itemsize
    out_bytes = jnp.dtype(out_dtype).itemsize
    # Dtype-aware sublane rounding for the row tile (f32:8, bf16:16, 8-bit:32).
    sublane = {4: 8, 2: 16, 1: 32}.get(min(x_bytes, out_bytes), 8)

    resident_bytes = w_bytes * (Din1 * D1 + Din2 * D2) + 4 * 3 * (D1 + D2)
    TM, vmem_limit = _tile_and_vmem(M, Din1, Din2, Dslab,
                                    x_bytes, out_bytes, resident_bytes, sublane)

    # No wrapper-side row padding: partial final block is handled by Pallas
    # (clipped reads give garbage rows whose per-row outputs are dropped on the
    # clipped write; LN/matmul are row-independent so real rows are unaffected).
    grid_m = pl.cdiv(M, TM)

    kernel = functools.partial(_fused_linear_ln_kernel, D1, D2, D1p)

    cost = pl.CostEstimate(
        flops=2 * M * (Din1 * D1 + Din2 * D2) + 10 * M * (D1 + D2),
        transcendentals=0,
        bytes_accessed=(x_bytes * M * (Din1 + Din2)
                        + w_bytes * (Din1 * D1 + Din2 * D2)
                        + 4 * 3 * (D1 + D2)
                        + out_bytes * M * Dslab),
    )

    slab = pl.pallas_call(
        kernel,
        out_shape=jax.ShapeDtypeStruct((M, Dslab), out_dtype),
        grid_spec=pltpu.PrefetchScalarGridSpec(
            num_scalar_prefetch=0,
            grid=(grid_m,),
            in_specs=[
                # Row-tiled activations (pipelined / double-buffered).
                pl.BlockSpec((TM, Din1), lambda i: (i, 0)),
                pl.BlockSpec((TM, Din2), lambda i: (i, 0)),
                # Weights / bias / gamma / beta: constant block index ->
                # fetched once, VMEM-resident across all grid steps.
                pl.BlockSpec((Din1, D1), lambda i: (0, 0)),
                pl.BlockSpec((1, D1), lambda i: (0, 0)),
                pl.BlockSpec((1, D1), lambda i: (0, 0)),
                pl.BlockSpec((1, D1), lambda i: (0, 0)),
                pl.BlockSpec((Din2, D2), lambda i: (0, 0)),
                pl.BlockSpec((1, D2), lambda i: (0, 0)),
                pl.BlockSpec((1, D2), lambda i: (0, 0)),
                pl.BlockSpec((1, D2), lambda i: (0, 0)),
            ],
            out_specs=pl.BlockSpec((TM, Dslab), lambda i: (i, 0)),
        ),
        compiler_params=pltpu.CompilerParams(
            dimension_semantics=("parallel",),   # independent row tiles
            vmem_limit_bytes=vmem_limit,
        ),
        cost_estimate=cost,
    )(x1_2d, x2_2d, w1, b1, g1, beta1, w2, b2, g2, beta2)

    out1 = slab[:, :D1]
    out2 = slab[:, D1p:D1p + D2]
    return out1, out2


class LinearSequenceEncoder:
    """JAX/Pallas port of the PyTorch LinearSequenceEncoder."""

    def __init__(self, in_dim1, in_dim2, out_dim1, out_dim2, key,
                 use_bf16_matmul=False):
        k1, k2, k3, k4 = jax.random.split(key, 4)
        # nn.Linear default init: U(-1/sqrt(fan_in), 1/sqrt(fan_in)); stored (in, out).
        s1 = 1.0 / jnp.sqrt(in_dim1)
        s2 = 1.0 / jnp.sqrt(in_dim2)
        self.w1 = jax.random.uniform(k1, (in_dim1, out_dim1), jnp.float32, -s1, s1)
        self.b1 = jax.random.uniform(k2, (1, out_dim1), jnp.float32, -s1, s1)
        self.w2 = jax.random.uniform(k3, (in_dim2, out_dim2), jnp.float32, -s2, s2)
        self.b2 = jax.random.uniform(k4, (1, out_dim2), jnp.float32, -s2, s2)
        # LayerNorm default init: gamma=1, beta=0.
        self.g1 = jnp.ones((1, out_dim1), jnp.float32)
        self.beta1 = jnp.zeros((1, out_dim1), jnp.float32)
        self.g2 = jnp.ones((1, out_dim2), jnp.float32)
        self.beta2 = jnp.zeros((1, out_dim2), jnp.float32)
        self.use_bf16_matmul = use_bf16_matmul

    def __call__(self, m1, m2):
        # m1: (B, S, in_dim1), m2: (B, S, in_dim2)  [feature-last layout]
        lead = m1.shape[:-1]
        x1 = m1.reshape((-1, m1.shape[-1]))
        x2 = m2.reshape((-1, m2.shape[-1]))
        y1, y2 = _fused_linear_layernorm(
            x1, x2,
            self.w1, self.b1, self.g1, self.beta1,
            self.w2, self.b2, self.g2, self.beta2,
            use_bf16_matmul=self.use_bf16_matmul,
        )
        return (
            y1.reshape(lead + (self.w1.shape[1],)),
            y2.reshape(lead + (self.w2.shape[1],)),
        )


def _reference(m1, m2, enc):
    """Pure-JAX reference for correctness check."""
    def proj(x, w, b, g, beta):
        y = jnp.einsum("bsi,io->bso", x, w) + b[0]
        mean = jnp.mean(y, axis=-1, keepdims=True)
        var = jnp.mean((y - mean) ** 2, axis=-1, keepdims=True)
        return (y - mean) * jax.lax.rsqrt(var + LN_EPS) * g[0] + beta[0]

    return (
        proj(m1, enc.w1, enc.b1, enc.g1, enc.beta1),
        proj(m2, enc.w2, enc.b2, enc.g2, enc.beta2),
    )


if __name__ == "__main__":
    key = jax.random.PRNGKey(0)
    k_params, k_m1, k_m2, k_m3, k_m4 = jax.random.split(key, 5)

    B, S = 2, 8
    in_dim1, out_dim1 = 16, 32
    in_dim2, out_dim2 = 24, 64

    enc = LinearSequenceEncoder(in_dim1, in_dim2, out_dim1, out_dim2, k_params)

    # Main check.
    m1 = jax.random.normal(k_m1, (B, S, in_dim1), jnp.float32)
    m2 = jax.random.normal(k_m2, (B, S, in_dim2), jnp.float32)
    out1, out2 = enc(m1, m2)
    jax.block_until_ready((out1, out2))
    ref1, ref2 = _reference(m1, m2, enc)
    assert out1.shape == (B, S, out_dim1) and out2.shape == (B, S, out_dim2)
    assert jnp.allclose(out1, ref1, atol=1e-4, rtol=1e-4)
    assert jnp.allclose(out2, ref2, atol=1e-4, rtol=1e-4)

    # Ragged-row check: batch*seq not a multiple of the sublane-rounded tile,
    # exercising the partial final block (no wrapper-side padding any more).
    B2, S2 = 3, 5
    m1b = jax.random.normal(k_m3, (B2, S2, in_dim1), jnp.float32)
    m2b = jax.random.normal(k_m4, (B2, S2, in_dim2), jnp.float32)
    out1b, out2b = enc(m1b, m2b)
    jax.block_until_ready((out1b, out2b))
    ref1b, ref2b = _reference(m1b, m2b, enc)
    assert jnp.allclose(out1b, ref1b, atol=1e-4, rtol=1e-4)
    assert jnp.allclose(out2b, ref2b, atol=1e-4, rtol=1e-4)

    print("KERNEL_OK")
</pallas_src>

<mosaic_0001>
module attributes {stable_mosaic.version = 11 : i64} {
  func.func @_fused_linear_ln_kernel(%arg0: i32, %arg1: memref<16x16xf32, #tpu.memory_space<vmem>>, %arg2: memref<16x24xf32, #tpu.memory_space<vmem>>, %arg3: memref<16x32xf32, #tpu.memory_space<vmem>>, %arg4: memref<1x32xf32, #tpu.memory_space<vmem>>, %arg5: memref<1x32xf32, #tpu.memory_space<vmem>>, %arg6: memref<1x32xf32, #tpu.memory_space<vmem>>, %arg7: memref<24x64xf32, #tpu.memory_space<vmem>>, %arg8: memref<1x64xf32, #tpu.memory_space<vmem>>, %arg9: memref<1x64xf32, #tpu.memory_space<vmem>>, %arg10: memref<1x64xf32, #tpu.memory_space<vmem>>, %arg11: memref<16x256xf32, #tpu.memory_space<vmem>>) attributes {dimension_semantics = [#tpu.dimension_semantics<parallel>], iteration_bounds = array<i64: 1>, scalar_prefetch = 0 : i64, scratch_operands = 0 : i64, tpu.core_type = #tpu.core_type<tc>, window_params = [{transform_indices = @transform_0, window_bounds = array<i64: 16, 16>}, {transform_indices = @transform_1, window_bounds = array<i64: 16, 24>}, {pipeline_mode = #tpu.pipeline_mode<synchronous>, transform_indices = @transform_2, window_bounds = array<i64: 16, 32>}, {pipeline_mode = #tpu.pipeline_mode<synchronous>, transform_indices = @transform_3, window_bounds = array<i64: 1, 32>}, {pipeline_mode = #tpu.pipeline_mode<synchronous>, transform_indices = @transform_4, window_bounds = array<i64: 1, 32>}, {pipeline_mode = #tpu.pipeline_mode<synchronous>, transform_indices = @transform_5, window_bounds = array<i64: 1, 32>}, {pipeline_mode = #tpu.pipeline_mode<synchronous>, transform_indices = @transform_6, window_bounds = array<i64: 24, 64>}, {pipeline_mode = #tpu.pipeline_mode<synchronous>, transform_indices = @transform_7, window_bounds = array<i64: 1, 64>}, {pipeline_mode = #tpu.pipeline_mode<synchronous>, transform_indices = @transform_8, window_bounds = array<i64: 1, 64>}, {pipeline_mode = #tpu.pipeline_mode<synchronous>, transform_indices = @transform_9, window_bounds = array<i64: 1, 64>}, {transform_indices = @transform_10, window_bounds = array<i64: 16, 256>}]} {
    %c0 = arith.constant 0 : index
    %c0_0 = arith.constant 0 : index
    %0 = vector.load %arg1[%c0, %c0_0] : memref<16x16xf32, #tpu.memory_space<vmem>>, vector<16x16xf32>
    %c0_1 = arith.constant 0 : index
    %c0_2 = arith.constant 0 : index
    %1 = vector.load %arg3[%c0_1, %c0_2] : memref<16x32xf32, #tpu.memory_space<vmem>>, vector<16x32xf32>
    %cst = arith.constant dense<0.000000e+00> : vector<16x32xf32>
    %2 = tpu.matmul %0, %1, %cst {dimension_numbers = #tpu.dot_dimension_numbers<[1], [0], [0], [1], [0, 0, 1, 1], [], []>} : vector<16x16xf32>, vector<16x32xf32>, vector<16x32xf32> -> vector<16x32xf32>
    %c0_3 = arith.constant 0 : index
    %c0_4 = arith.constant 0 : index
    %3 = vector.load %arg4[%c0_3, %c0_4] : memref<1x32xf32, #tpu.memory_space<vmem>>, vector<1x32xf32>
    %4 = vector.broadcast %3 : vector<1x32xf32> to vector<16x32xf32>
    %5 = arith.addf %2, %4 : vector<16x32xf32>
    %cst_5 = arith.constant dense<0.000000e+00> : vector<16xf32>
    %6 = vector.multi_reduction <add>, %5, %cst_5 [1] : vector<16x32xf32> to vector<16xf32>
    %7 = vector.shape_cast %6 : vector<16xf32> to vector<16x1xf32>
    %cst_6 = arith.constant 3.200000e+01 : f32
    %8 = vector.broadcast %cst_6 : f32 to vector<16x1xf32>
    %9 = arith.divf %7, %8 : vector<16x1xf32>
    %10 = vector.broadcast %9 : vector<16x1xf32> to vector<16x32xf32>
    %11 = arith.subf %5, %10 : vector<16x32xf32>
    %12 = arith.mulf %11, %11 : vector<16x32xf32>
    %cst_7 = arith.constant dense<0.000000e+00> : vector<16xf32>
    %13 = vector.multi_reduction <add>, %12, %cst_7 [1] : vector<16x32xf32> to vector<16xf32>
    %14 = vector.shape_cast %13 : vector<16xf32> to vector<16x1xf32>
    %cst_8 = arith.constant 3.200000e+01 : f32
    %15 = vector.broadcast %cst_8 : f32 to vector<16x1xf32>
    %16 = arith.divf %14, %15 : vector<16x1xf32>
    %cst_9 = arith.constant 9.99999974E-6 : f32
    %17 = vector.broadcast %cst_9 : f32 to vector<16x1xf32>
    %18 = arith.addf %16, %17 : vector<16x1xf32>
    %19 = math.rsqrt %18 : vector<16x1xf32>
    %20 = vector.broadcast %19 : vector<16x1xf32> to vector<16x32xf32>
    %21 = arith.mulf %11, %20 : vector<16x32xf32>
    %c0_10 = arith.constant 0 : index
    %c0_11 = arith.constant 0 : index
    %22 = vector.load %arg5[%c0_10, %c0_11] : memref<1x32xf32, #tpu.memory_space<vmem>>, vector<1x32xf32>
    %23 = vector.broadcast %22 : vector<1x32xf32> to vector<16x32xf32>
    %24 = arith.mulf %21, %23 : vector<16x32xf32>
    %c0_12 = arith.constant 0 : index
    %c0_13 = arith.constant 0 : index
    %25 = vector.load %arg6[%c0_12, %c0_13] : memref<1x32xf32, #tpu.memory_space<vmem>>, vector<1x32xf32>
    %26 = vector.broadcast %25 : vector<1x32xf32> to vector<16x32xf32>
    %27 = arith.addf %24, %26 : vector<16x32xf32>
    %c0_14 = arith.constant 0 : index
    %c0_15 = arith.constant 0 : index
    %28 = vector.load %arg11[%c0_14, %c0_15] : memref<16x256xf32, #tpu.memory_space<vmem>>, vector<16x32xf32>
    tpu.vector_store %arg11[%c0_14, %c0_15], %27 {strides = array<i32>} : memref<16x256xf32, #tpu.memory_space<vmem>>, vector<16x32xf32>,
    %c0_16 = arith.constant 0 : index
    %c0_17 = arith.constant 0 : index
    %29 = vector.load %arg2[%c0_16, %c0_17] : memref<16x24xf32, #tpu.memory_space<vmem>>, vector<16x24xf32>
    %c0_18 = arith.constant 0 : index
    %c0_19 = arith.constant 0 : index
    %30 = vector.load %arg7[%c0_18, %c0_19] : memref<24x64xf32, #tpu.memory_space<vmem>>, vector<24x64xf32>
    %cst_20 = arith.constant dense<0.000000e+00> : vector<16x64xf32>
    %31 = tpu.matmul %29, %30, %cst_20 {dimension_numbers = #tpu.dot_dimension_numbers<[1], [0], [0], [1], [0, 0, 1, 1], [], []>} : vector<16x24xf32>, vector<24x64xf32>, vector<16x64xf32> -> vector<16x64xf32>
    %c0_21 = arith.constant 0 : index
    %c0_22 = arith.constant 0 : index
    %32 = vector.load %arg8[%c0_21, %c0_22] : memref<1x64xf32, #tpu.memory_space<vmem>>, vector<1x64xf32>
    %33 = vector.broadcast %32 : vector<1x64xf32> to vector<16x64xf32>
    %34 = arith.addf %31, %33 : vector<16x64xf32>
    %cst_23 = arith.constant dense<0.000000e+00> : vector<16xf32>
    %35 = vector.multi_reduction <add>, %34, %cst_23 [1] : vector<16x64xf32> to vector<16xf32>
    %36 = vector.shape_cast %35 : vector<16xf32> to vector<16x1xf32>
    %cst_24 = arith.constant 6.400000e+01 : f32
    %37 = vector.broadcast %cst_24 : f32 to vector<16x1xf32>
    %38 = arith.divf %36, %37 : vector<16x1xf32>
    %39 = vector.broadcast %38 : vector<16x1xf32> to vector<16x64xf32>
    %40 = arith.subf %34, %39 : vector<16x64xf32>
    %41 = arith.mulf %40, %40 : vector<16x64xf32>
    %cst_25 = arith.constant dense<0.000000e+00> : vector<16xf32>
    %42 = vector.multi_reduction <add>, %41, %cst_25 [1] : vector<16x64xf32> to vector<16xf32>
    %43 = vector.shape_cast %42 : vector<16xf32> to vector<16x1xf32>
    %cst_26 = arith.constant 6.400000e+01 : f32
    %44 = vector.broadcast %cst_26 : f32 to vector<16x1xf32>
    %45 = arith.divf %43, %44 : vector<16x1xf32>
    %cst_27 = arith.constant 9.99999974E-6 : f32
    %46 = vector.broadcast %cst_27 : f32 to vector<16x1xf32>
    %47 = arith.addf %45, %46 : vector<16x1xf32>
    %48 = math.rsqrt %47 : vector<16x1xf32>
    %49 = vector.broadcast %48 : vector<16x1xf32> to vector<16x64xf32>
    %50 = arith.mulf %40, %49 : vector<16x64xf32>
    %c0_28 = arith.constant 0 : index
    %c0_29 = arith.constant 0 : index
    %51 = vector.load %arg9[%c0_28, %c0_29] : memref<1x64xf32, #tpu.memory_space<vmem>>, vector<1x64xf32>
    %52 = vector.broadcast %51 : vector<1x64xf32> to vector<16x64xf32>
    %53 = arith.mulf %50, %52 : vector<16x64xf32>
    %c0_30 = arith.constant 0 : index
    %c0_31 = arith.constant 0 : index
    %54 = vector.load %arg10[%c0_30, %c0_31] : memref<1x64xf32, #tpu.memory_space<vmem>>, vector<1x64xf32>
    %55 = vector.broadcast %54 : vector<1x64xf32> to vector<16x64xf32>
    %56 = arith.addf %53, %55 : vector<16x64xf32>
    %c0_32 = arith.constant 0 : index
    %c128 = arith.constant 128 : index
    %57 = vector.load %arg11[%c0_32, %c128] : memref<16x256xf32, #tpu.memory_space<vmem>>, vector<16x64xf32>
    tpu.vector_store %arg11[%c0_32, %c128], %56 {strides = array<i32>} : memref<16x256xf32, #tpu.memory_space<vmem>>, vector<16x64xf32>,
    return
  }
  func.func @transform_0(%arg0: i32) -> (i32, i32) {
    %c0_i32 = arith.constant 0 : i32
    %c0_i32_0 = arith.constant 0 : i32
    return %arg0, %c0_i32 : i32, i32
  }
  func.func @transform_1(%arg0: i32) -> (i32, i32) {
    %c0_i32 = arith.constant 0 : i32
    %c0_i32_0 = arith.constant 0 : i32
    return %arg0, %c0_i32 : i32, i32
  }
  func.func @transform_2(%arg0: i32) -> (i32, i32) {
    %c0_i32 = arith.constant 0 : i32
    %c0_i32_0 = arith.constant 0 : i32
    %c0_i32_1 = arith.constant 0 : i32
    return %c0_i32, %c0_i32_0 : i32, i32
  }
  func.func @transform_3(%arg0: i32) -> (i32, i32) {
    %c0_i32 = arith.constant 0 : i32
    %c0_i32_0 = arith.constant 0 : i32
    %c0_i32_1 = arith.constant 0 : i32
    return %c0_i32, %c0_i32_0 : i32, i32
  }
  func.func @transform_4(%arg0: i32) -> (i32, i32) {
    %c0_i32 = arith.constant 0 : i32
    %c0_i32_0 = arith.constant 0 : i32
    %c0_i32_1 = arith.constant 0 : i32
    return %c0_i32, %c0_i32_0 : i32, i32
  }
  func.func @transform_5(%arg0: i32) -> (i32, i32) {
    %c0_i32 = arith.constant 0 : i32
    %c0_i32_0 = arith.constant 0 : i32
    %c0_i32_1 = arith.constant 0 : i32
    return %c0_i32, %c0_i32_0 : i32, i32
  }
  func.func @transform_6(%arg0: i32) -> (i32, i32) {
    %c0_i32 = arith.constant 0 : i32
    %c0_i32_0 = arith.constant 0 : i32
    %c0_i32_1 = arith.constant 0 : i32
    return %c0_i32, %c0_i32_0 : i32, i32
  }
  func.func @transform_7(%arg0: i32) -> (i32, i32) {
    %c0_i32 = arith.constant 0 : i32
    %c0_i32_0 = arith.constant 0 : i32
    %c0_i32_1 = arith.constant 0 : i32
    return %c0_i32, %c0_i32_0 : i32, i32
  }
  func.func @transform_8(%arg0: i32) -> (i32, i32) {
    %c0_i32 = arith.constant 0 : i32
    %c0_i32_0 = arith.constant 0 : i32
    %c0_i32_1 = arith.constant 0 : i32
    return %c0_i32, %c0_i32_0 : i32, i32
  }
  func.func @transform_9(%arg0: i32) -> (i32, i32) {
    %c0_i32 = arith.constant 0 : i32
    %c0_i32_0 = arith.constant 0 : i32
    %c0_i32_1 = arith.constant 0 : i32
    return %c0_i32, %c0_i32_0 : i32, i32
  }
  func.func @transform_10(%arg0: i32) -> (i32, i32) {
    %c0_i32 = arith.constant 0 : i32
    %c0_i32_0 = arith.constant 0 : i32
    return %arg0, %c0_i32 : i32, i32
  }
}

</mosaic_0001>

<llo_original>
// kernel: tpu_custom_call.1
$region0: #{tpu_custom_call.1}
  #allocation0 [shape = 'u32[]', space=smem, size = 0x4, offset = 0x4, fixed_abs, tag = 'smem constant byte address 0x4 - core index']
  #allocation1 [shape = 'u32[72,128]{1,0:T(1,128)}', space=vmem, size = 0x9000, scoped, tag = 'internal scratch']
  %s0 = inlined_call_operand.hbm [shape: f32[16,16], index: 0, kind: input, shape index: {}]
  %s1 = inlined_call_operand.hbm [shape: f32[16,24], index: 1, kind: input, shape index: {}]
  %s2 = inlined_call_operand.hbm [shape: f32[16,32], index: 2, kind: input, shape index: {}]
  %s3 = inlined_call_operand.vmem [shape: f32[1,32], index: 3, kind: input, shape index: {}]
  %s4 = inlined_call_operand.vmem [shape: f32[1,32], index: 4, kind: input, shape index: {}]
  %s5 = inlined_call_operand.vmem [shape: f32[1,32], index: 5, kind: input, shape index: {}]
  %s6 = inlined_call_operand.hbm [shape: f32[24,64], index: 6, kind: input, shape index: {}]
  %s7 = inlined_call_operand.vmem [shape: f32[1,64], index: 7, kind: input, shape index: {}]
  %s8 = inlined_call_operand.vmem [shape: f32[1,64], index: 8, kind: input, shape index: {}]
  %s9 = inlined_call_operand.vmem [shape: f32[1,64], index: 9, kind: input, shape index: {}]
  %s10 = inlined_call_operand.hbm [shape: f32[16,256], index: 10, kind: output, shape index: {}]
  %s11 = sld [smem:[#allocation0]]
  $region66: #{tpu_custom_call.1} parent=0
    _
  %s13 = ssub.s32 1, %s11
  %s14 = scalar_select 0, %s13, %s11
  $region1: #{tpu_custom_call.1} parent=0
    #allocation2 [shape = 'u8[8192]{0}', space=vmem, size = 0x2000, scoped, tag = 'input window, operand 0, single buffered']
    #allocation3 [shape = 's32[1]{0}', space=sflag, size = 0x4, scoped, tag = 'scoped memory for tpu_custom_call.1']
    #allocation4 [shape = 's32[1]{0}', space=sflag, size = 0x4, scoped, tag = 'scoped memory for tpu_custom_call.1']
    #allocation5 [shape = 'u8[8192]{0}', space=vmem, size = 0x2000, scoped, tag = 'input window, operand 1, single buffered']
    #allocation6 [shape = 's32[1]{0}', space=sflag, size = 0x4, scoped, tag = 'scoped memory for tpu_custom_call.1']
    #allocation7 [shape = 'u8[8192]{0}', space=vmem, size = 0x2000, scoped, tag = 'input window, operand 2, single buffered']
    #allocation8 [shape = 'u8[12288]{0}', space=vmem, size = 0x3000, scoped, tag = 'input window, operand 6, single buffered']
    #allocation9 [shape = 's32[1]{0}', space=sflag, size = 0x4, scoped, tag = 'scoped memory for tpu_custom_call.1']
    #allocation10 [shape = 'u8[16384]{0}', space=vmem, size = 0x4000, scoped, tag = 'output window, operand 0, single buffered']
    %15 = vsyncpa [#allocation3], 0
    %16 = vsyncpa [#allocation6], 0
    %17 = vsyncpa [#allocation9], 0
    %18 = vsyncpa [#allocation4], 0
    // Predicated region
    $region2: #{tpu_custom_call.1} parent=1 // pred_check
      _
    $region3: #{tpu_custom_call.1} parent=1 // pred_check_branch
      %20 = sbr.rel (0) target = $region5
    $region4: #{tpu_custom_call.1} parent=1 // pred_region
      %22 = vsyncadd [#allocation3], 0
      %s23 = sshll.u32 %s0, 4
      %s24 = int_to_ptr.hbm [resolvable:$true] %s23
      %s25 = sshll.u32 [#allocation2], 4
      %s26 = int_to_ptr.vmem [resolvable:$true] %s25
      %31 = dma.hbm_to_vmem [thread:$0]  %s24, 256, %s26, [#allocation3], 128, 128, 8
    $region5: #{tpu_custom_call.1} parent=1 // pred_fallthru
      _
    // Predicated region
    $region6: #{tpu_custom_call.1} parent=1 // pred_check
      _
    $region7: #{tpu_custom_call.1} parent=1 // pred_check_branch
      %33 = sbr.rel (0) target = $region9
    $region8: #{tpu_custom_call.1} parent=1 // pred_region
      %35 = vsyncadd [#allocation6], 0
      %s36 = sshll.u32 %s1, 4
      %s37 = int_to_ptr.hbm [resolvable:$true] %s36
      %s38 = sshll.u32 [#allocation5], 4
      %s39 = int_to_ptr.vmem [resolvable:$true] %s38
      %44 = dma.hbm_to_vmem [thread:$0]  %s37, 256, %s39, [#allocation6], 128, 128, 8
    $region9: #{tpu_custom_call.1} parent=1 // pred_fallthru
      _
    // Predicated region
    $region10: #{tpu_custom_call.1} parent=1 // pred_check
      _
    $region11: #{tpu_custom_call.1} parent=1 // pred_check_branch
      %46 = sbr.rel (0) target = $region13
    $region12: #{tpu_custom_call.1} parent=1 // pred_region
      %48 = vsyncadd [#allocation6], 0
      %s49 = sshll.u32 %s2, 4
      %s50 = int_to_ptr.hbm [resolvable:$true] %s49
      %s51 = sshll.u32 [#allocation7], 4
      %s52 = int_to_ptr.vmem [resolvable:$true] %s51
      %57 = dma.hbm_to_vmem [thread:$0]  %s50, 256, %s52, [#allocation6], 128, 128, 8
    $region13: #{tpu_custom_call.1} parent=1 // pred_fallthru
      _
    // Predicated region
    $region14: #{tpu_custom_call.1} parent=1 // pred_check
      _
    $region15: #{tpu_custom_call.1} parent=1 // pred_check_branch
      %59 = sbr.rel (0) target = $region17
    $region16: #{tpu_custom_call.1} parent=1 // pred_region
      _
    $region17: #{tpu_custom_call.1} parent=1 // pred_fallthru
      _
    // Predicated region
    $region18: #{tpu_custom_call.1} parent=1 // pred_check
      _
    $region19: #{tpu_custom_call.1} parent=1 // pred_check_branch
      %61 = sbr.rel (0) target = $region21
    $region20: #{tpu_custom_call.1} parent=1 // pred_region
      _
    $region21: #{tpu_custom_call.1} parent=1 // pred_fallthru
      _
    // Predicated region
    $region22: #{tpu_custom_call.1} parent=1 // pred_check
      _
    $region23: #{tpu_custom_call.1} parent=1 // pred_check_branch
      %63 = sbr.rel (0) target = $region25
    $region24: #{tpu_custom_call.1} parent=1 // pred_region
      _
    $region25: #{tpu_custom_call.1} parent=1 // pred_fallthru
      _
    // Predicated region
    $region26: #{tpu_custom_call.1} parent=1 // pred_check
      _
    $region27: #{tpu_custom_call.1} parent=1 // pred_check_branch
      %65 = sbr.rel (0) target = $region29
    $region28: #{tpu_custom_call.1} parent=1 // pred_region
      %67 = vsyncadd [#allocation9], 0
      %s68 = sshll.u32 %s6, 4
      %s69 = int_to_ptr.hbm [resolvable:$true] %s68
      %s70 = sshll.u32 [#allocation8], 4
      %s71 = int_to_ptr.vmem [resolvable:$true] %s70
      %76 = dma.hbm_to_vmem [thread:$0]  %s69, 384, %s71, [#allocation9], 128, 128, 8
    $region29: #{tpu_custom_call.1} parent=1 // pred_fallthru
      _
    // Predicated region
    $region30: #{tpu_custom_call.1} parent=1 // pred_check
      _
    $region31: #{tpu_custom_call.1} parent=1 // pred_check_branch
      %78 = sbr.rel (0) target = $region33
    $region32: #{tpu_custom_call.1} parent=1 // pred_region
      _
    $region33: #{tpu_custom_call.1} parent=1 // pred_fallthru
      _
    // Predicated region
    $region34: #{tpu_custom_call.1} parent=1 // pred_check
      _
    $region35: #{tpu_custom_call.1} parent=1 // pred_check_branch
      %80 = sbr.rel (0) target = $region37
    $region36: #{tpu_custom_call.1} parent=1 // pred_region
      _
    $region37: #{tpu_custom_call.1} parent=1 // pred_fallthru
      _
    // Predicated region
    $region38: #{tpu_custom_call.1} parent=1 // pred_check
      _
    $region39: #{tpu_custom_call.1} parent=1 // pred_check_branch
      %82 = sbr.rel (0) target = $region41
    $region40: #{tpu_custom_call.1} parent=1 // pred_region
      _
    $region41: #{tpu_custom_call.1} parent=1 // pred_fallthru
      _
    // Predicated region
    $region42: #{tpu_custom_call.1} parent=1 // pred_check
      _
    $region43: #{tpu_custom_call.1} parent=1 // pred_check_branch
      %84 = sbr.rel (0) target = $region45
    $region44: #{tpu_custom_call.1} parent=1 // pred_region
      %86 = dma.done [#allocation3], 256
    $region45: #{tpu_custom_call.1} parent=1 // pred_fallthru
      _
    // Predicated region
    $region46: #{tpu_custom_call.1} parent=1 // pred_check
      _
    $region47: #{tpu_custom_call.1} parent=1 // pred_check_branch
      %88 = sbr.rel (0) target = $region49
    $region48: #{tpu_custom_call.1} parent=1 // pred_region
      %90 = dma.done [#allocation6], 256
    $region49: #{tpu_custom_call.1} parent=1 // pred_fallthru
      _
    // Predicated region
    $region50: #{tpu_custom_call.1} parent=1 // pred_check
      _
    $region51: #{tpu_custom_call.1} parent=1 // pred_check_branch
      %92 = sbr.rel (0) target = $region53
    $region52: #{tpu_custom_call.1} parent=1 // pred_region
      %94 = dma.done [#allocation6], 256
    $region53: #{tpu_custom_call.1} parent=1 // pred_fallthru
      _
    // Predicated region
    $region54: #{tpu_custom_call.1} parent=1 // pred_check
      _
    $region55: #{tpu_custom_call.1} parent=1 // pred_check_branch
      %96 = sbr.rel (0) target = $region57
    $region56: #{tpu_custom_call.1} parent=1 // pred_region
      %98 = dma.done [#allocation9], 384
    $region57: #{tpu_custom_call.1} parent=1 // pred_fallthru
      _
    %v99 = vld [vmem:[#allocation2] sm:$0xff]
    %v100 = vld [vmem:[#allocation2 + $0x8] sm:$0xff]
    %v101 = vld [vmem:[#allocation7] sm:$0xff]
    %v102 = vld [vmem:[#allocation7 + $0x8] sm:$0xff]
    %v103 = vld [vmem:[%s3] sm:$0x1]
    %v105 = vperm.slane %v103, 0
    %vm107 = vcmask 130048
    %v109 = vsel %vm107, %v99, 0
    %v112 = vsel %vm107, %v100, 0
    %114 = vmatpush.msra.mxu0 0.0
    %115 = vmatpush.msra.mxu0 0.0
    %116 = vmatpush.msra.mxu0 0.0
    %117 = vmatpush.msra.mxu0 0.0
    %118 = vmatpush.msra.mxu0 0.0
    %119 = vmatpush.msra.mxu0 0.0
    %120 = vmatpush.msra.mxu0 0.0
    %121 = vmatpush.msra.mxu0 0.0
    %122 = vmatpush.msra.mxu0 0.0
    %123 = vmatpush.msra.mxu0 0.0
    %124 = vmatpush.msra.mxu0 0.0
    %125 = vmatpush.msra.mxu0 0.0
    %126 = vmatpush.msra.mxu0 0.0
    %127 = vmatpush.msra.mxu0 0.0
    %128 = vmatpush.msra.mxu0 %v102
    %129 = vmatpush.msra.mxu0 %v101
    %130 = vmatmul.f32.gmra.mxu0 %v109
    %v131 = vpop.f32.mrf.mxu0
    %v132 = vadd.f32 %v105, %v131
    %133 = vmatmul.f32.gmra.mxu0 %v112
    %v134 = vpop.f32.mrf.mxu0
    %v135 = vadd.f32 %v105, %v134
    %136 = vdwg.mxu0
    %vm137 = vcmask 261120
    %v138 = vsel %vm137, %v132, 0.0
    %139 = vadd.xlane.f32.xlu0 %v138
    %v140 = vpop.xlane.xlu0 %139
    %v141 = vsel %vm137, %v135, 0.0
    %142 = vadd.xlane.f32.xlu0 %v141
    %v143 = vpop.xlane.xlu0 %142
    %v144 = vrcp.pop 32.0
    %v145 = vmul.f32 32.0, %v144
    %v146 = vsub.f32 1.0, %v145
    %v147 = vmul.f32 %v144, %v146
    %v148 = vadd.f32 %v144, %v147
    %vm149 = vweird.f32 %v144
    %v150 = vsel %vm149, %v144, %v148
    %v151 = vmul.f32 %v140, %v150
    %v152 = vmul.f32 %v143, %v150
    %v153 = vsub.f32 %v132, %v151
    %v154 = vsub.f32 %v135, %v152
    %v155 = vmul.f32 %v153, %v153
    %v156 = vmul.f32 %v154, %v154
    %v157 = vsel %vm137, %v155, 0.0
    %158 = vadd.xlane.f32.xlu0 %v157
    %v159 = vpop.xlane.xlu0 %158
    %v160 = vsel %vm137, %v156, 0.0
    %161 = vadd.xlane.f32.xlu0 %v160
    %v162 = vpop.xlane.xlu0 %161
    %v163 = vmul.f32 %v159, %v150
    %v164 = vmul.f32 %v162, %v150
    %v165 = vadd.f32 %v163, 1e-05
    %v166 = vadd.f32 %v164, 1e-05
    %v167 = vrsqrt.pop %v165
    %v168 = vmul.f32 %v167, %v165
    %v169 = vmul.f32 %v168, %v167
    %v170 = vmul.f32 0.5, %v169
    %v171 = vsub.f32 1.5, %v170
    %v172 = vmul.f32 %v167, %v171
    %vm173 = vweird.f32 %v165
    %vm174 = vweird.f32 %v167
    %vm175 = vmor %vm173, %vm174
    %v176 = vsel %vm175, %v167, %v172
    %v177 = vrsqrt.pop %v166
    %v178 = vmul.f32 %v177, %v166
    %v179 = vmul.f32 %v178, %v177
    %v180 = vmul.f32 0.5, %v179
    %v181 = vsub.f32 1.5, %v180
    %v182 = vmul.f32 %v177, %v181
    %vm183 = vweird.f32 %v166
    %vm184 = vweird.f32 %v177
    %vm185 = vmor %vm183, %vm184
    %v186 = vsel %vm185, %v177, %v182
    %v187 = vmul.f32 %v153, %v176
    %v188 = vmul.f32 %v154, %v186
    %v189 = vld [vmem:[%s4] sm:$0x1]
    %v191 = vperm.slane %v189, 0
    %v193 = vmul.f32 %v187, %v191
    %v194 = vmul.f32 %v188, %v191
    %v195 = vld [vmem:[%s5] sm:$0x1]
    %v197 = vperm.slane %v195, 0
    %v199 = vadd.f32 %v193, %v197
    %v200 = vadd.f32 %v194, %v197
    %201 = vst.msk [vmem:[#allocation10] sm:$0xff] %vm137, %v199
    %202 = vst.msk [vmem:[#allocation10 + $0x10] sm:$0xff] %vm137, %v200
    %v203 = vld [vmem:[#allocation5] sm:$0xff]
    %v204 = vld [vmem:[#allocation5 + $0x8] sm:$0xff]
    %v205 = vld [vmem:[#allocation8] sm:$0xff]
    %v206 = vld [vmem:[#allocation8 + $0x8] sm:$0xff]
    %v207 = vld [vmem:[#allocation8 + $0x10] sm:$0xff]
    %v208 = vld [vmem:[%s7] sm:$0x1]
    %v210 = vperm.slane %v208, 0
    %vm212 = vcmask 195584
    %v214 = vsel %vm212, %v203, 0
    %v217 = vsel %vm212, %v204, 0
    %219 = vmatpush.msra.mxu0 0.0
    %220 = vmatpush.msra.mxu0 0.0
    %221 = vmatpush.msra.mxu0 0.0
    %222 = vmatpush.msra.mxu0 0.0
    %223 = vmatpush.msra.mxu0 0.0
    %224 = vmatpush.msra.mxu0 0.0
    %225 = vmatpush.msra.mxu0 0.0
    %226 = vmatpush.msra.mxu0 0.0
    %227 = vmatpush.msra.mxu0 0.0
    %228 = vmatpush.msra.mxu0 0.0
    %229 = vmatpush.msra.mxu0 0.0
    %230 = vmatpush.msra.mxu0 0.0
    %231 = vmatpush.msra.mxu0 0.0
    %232 = vmatpush.msra.mxu0 %v207
    %233 = vmatpush.msra.mxu0 %v206
    %234 = vmatpush.msra.mxu0 %v205
    %235 = vmatmul.f32.gmra.mxu0 %v214
    %v236 = vpop.f32.mrf.mxu0
    %v237 = vadd.f32 %v210, %v236
    %238 = vmatmul.f32.gmra.mxu0 %v217
    %v239 = vpop.f32.mrf.mxu0
    %v240 = vadd.f32 %v210, %v239
    %241 = vdwg.mxu0
    %vm242 = vcmask 523264
    %v243 = vsel %vm242, %v237, 0.0
    %244 = vadd.xlane.f32.xlu0 %v243
    %v245 = vpop.xlane.xlu0 %244
    %v246 = vsel %vm242, %v240, 0.0
    %247 = vadd.xlane.f32.xlu0 %v246
    %v248 = vpop.xlane.xlu0 %247
    %v249 = vrcp.pop 64.0
    %v250 = vmul.f32 64.0, %v249
    %v251 = vsub.f32 1.0, %v250
    %v252 = vmul.f32 %v249, %v251
    %v253 = vadd.f32 %v249, %v252
    %vm254 = vweird.f32 %v249
    %v255 = vsel %vm254, %v249, %v253
    %v256 = vmul.f32 %v245, %v255
    %v257 = vmul.f32 %v248, %v255
    %v258 = vsub.f32 %v237, %v256
    %v259 = vsub.f32 %v240, %v257
    %v260 = vmul.f32 %v258, %v258
    %v261 = vmul.f32 %v259, %v259
    %v262 = vsel %vm242, %v260, 0.0
    %263 = vadd.xlane.f32.xlu0 %v262
    %v264 = vpop.xlane.xlu0 %263
    %v265 = vsel %vm242, %v261, 0.0
    %266 = vadd.xlane.f32.xlu0 %v265
    %v267 = vpop.xlane.xlu0 %266
    %v268 = vmul.f32 %v264, %v255
    %v269 = vmul.f32 %v267, %v255
    %v270 = vadd.f32 %v268, 1e-05
    %v271 = vadd.f32 %v269, 1e-05
    %v272 = vrsqrt.pop %v270
    %v273 = vmul.f32 %v272, %v270
    %v274 = vmul.f32 %v273, %v272
    %v275 = vmul.f32 0.5, %v274
    %v276 = vsub.f32 1.5, %v275
    %v277 = vmul.f32 %v272, %v276
    %vm278 = vweird.f32 %v270
    %vm279 = vweird.f32 %v272
    %vm280 = vmor %vm278, %vm279
    %v281 = vsel %vm280, %v272, %v277
    %v282 = vrsqrt.pop %v271
    %v283 = vmul.f32 %v282, %v271
    %v284 = vmul.f32 %v283, %v282
    %v285 = vmul.f32 0.5, %v284
    %v286 = vsub.f32 1.5, %v285
    %v287 = vmul.f32 %v282, %v286
    %vm288 = vweird.f32 %v271
    %vm289 = vweird.f32 %v282
    %vm290 = vmor %vm288, %vm289
    %v291 = vsel %vm290, %v282, %v287
    %v292 = vmul.f32 %v258, %v281
    %v293 = vmul.f32 %v259, %v291
    %v294 = vld [vmem:[%s8] sm:$0x1]
    %v296 = vperm.slane %v294, 0
    %v298 = vmul.f32 %v292, %v296
    %v299 = vmul.f32 %v293, %v296
    %v300 = vld [vmem:[%s9] sm:$0x1]
    %v302 = vperm.slane %v300, 0
    %v304 = vadd.f32 %v298, %v302
    %v305 = vadd.f32 %v299, %v302
    %306 = vst.msk [vmem:[#allocation10 + $0x8] sm:$0xff] %vm242, %v304
    %307 = vst.msk [vmem:[#allocation10 + $0x18] sm:$0xff] %vm242, %v305
    // Predicated region
    $region58: #{tpu_custom_call.1} parent=1 // pred_check
      _
    $region59: #{tpu_custom_call.1} parent=1 // pred_check_branch
      %309 = sbr.rel (0) target = $region61
    $region60: #{tpu_custom_call.1} parent=1 // pred_region
      %311 = vsyncadd [#allocation4], 0
      %s312 = sshll.u32 [#allocation10], 4
      %s313 = int_to_ptr.vmem [resolvable:$true] %s312
      %s314 = sshll.u32 %s10, 4
      %s315 = int_to_ptr.hbm [resolvable:$true] %s314
      %320 = dma.vmem_to_hbm [thread:$0]  %s313, 512, %s315, [#allocation4], 256, 256, 16
    $region61: #{tpu_custom_call.1} parent=1 // pred_fallthru
      _
    // Predicated region
    $region62: #{tpu_custom_call.1} parent=1 // pred_check
      _
    $region63: #{tpu_custom_call.1} parent=1 // pred_check_branch
      %322 = sbr.rel (0) target = $region65
    $region64: #{tpu_custom_call.1} parent=1 // pred_region
      %324 = dma.done [#allocation4], 512
    $region65: #{tpu_custom_call.1} parent=1 // pred_fallthru
      _
    %325 = vsyncpa [#allocation3], 1
    %326 = vsyncpa [#allocation6], 1
    %327 = vsyncpa [#allocation9], 1
    %328 = vsyncpa [#allocation4], 1

</llo_original>
